<compile_context>
chip_gen: v7x
topology: tpu7x:2x2x1
jax: 0.10.0
libtpu: 0.0.40
codegen_flags: <defaults>
</compile_context>

<pallas_src>
import functools
import numpy as np
import jax
import jax.numpy as jnp
from jax.experimental import pallas as pl
from jax.experimental.pallas import tpu as pltpu


def find_closest_factor(N, M):
    closest, best = None, float("inf")
    for d in range(1, int(N ** 0.5) + 1):
        if N % d == 0:
            for f in (d, N // d):
                if abs(f - M) < best:
                    best, closest = abs(f - M), f
    return int(closest)


def _round_up(x, m):
    return (x + m - 1) // m * m


def mxdna_kernel(x_ref, wglu_ref, wconv_ref, gamma_ref, beta_ref, wpost_ref,
                 o_ref, g_scr, *, kernel_size, h_true, eps):
    """Fused forward for one (batch, seq-tile) grid point.

    x_ref:     (T_S*K, Hp) bf16   contiguous input rows
    wglu_ref:  (Hp, 2*Hp)  bf16   [a-half | b-half] of pointwise_conv_pre
    wconv_ref: (K, Hp, Hp) bf16   per-tap block-diagonal grouped-conv matrices
    gamma/beta:(1, Hp)     f32    LayerNorm affine (zero in padded lanes)
    wpost_ref: (Hp, Hp)    bf16   pointwise_conv_post (transposed)
    o_ref:     (T_S, Hp)          output tile
    g_scr:     (T_S*K, Hp) f32    VMEM scratch holding the GLU activation
    """
    K = kernel_size
    t_s, h_pad = o_ref.shape

    # --- pointwise_conv_pre + GLU: one big matmul on the contiguous slab ----
    h2 = jnp.dot(x_ref[...], wglu_ref[...],
                 preferred_element_type=jnp.float32)        # (T_S*K, 2*Hp) f32
    a = h2[:, :h_pad]
    b = h2[:, h_pad:]
    g_scr[...] = a * jax.nn.sigmoid(b)                      # GLU (f32)

    # --- grouped conv with stride == kernel_size:
    #     K per-tap matmuls over sublane-strided slices of the GLU output ----
    c = jnp.zeros((t_s, h_pad), jnp.float32)
    for k in range(K):                                      # static unroll (K small)
        gk = g_scr[pl.ds(k, t_s, stride=K), :].astype(jnp.bfloat16)
        c = c + jnp.dot(gk, wconv_ref[k],
                        preferred_element_type=jnp.float32)

    # --- LayerNorm over the TRUE hidden width (padded lanes of c are 0) -----
    inv_h = 1.0 / float(h_true)
    mean = jnp.sum(c, axis=-1, keepdims=True) * inv_h
    if h_true == h_pad:
        d = c - mean
        var = jnp.sum(d * d, axis=-1, keepdims=True) * inv_h
    else:
        # E[x^2] - E[x]^2: the exactly-zero padded columns drop out of both sums.
        var = jnp.sum(c * c, axis=-1, keepdims=True) * inv_h - mean * mean
    y = (c - mean) * jax.lax.rsqrt(var + eps)
    y = y * gamma_ref[...] + beta_ref[...]

    # --- SiLU / Swish -------------------------------------------------------
    y = y * jax.nn.sigmoid(y)

    # --- pointwise_conv_post ------------------------------------------------
    out = jnp.dot(y.astype(jnp.bfloat16), wpost_ref[...],
                  preferred_element_type=jnp.float32)
    o_ref[...] = out.astype(o_ref.dtype)


def mxdna_convnet(x, w_pre, conv_w, gamma, beta, w_post, kernel_size, groups,
                  *, seq_tile=128, eps=1e-5):
    """Pallas forward of MxDNAConvNet.

    x:      (B, S, H)      activations
    w_pre:  (2H, H)        nn.Linear(H, 2H, bias=False).weight
    conv_w: (H, H//G, K)   nn.Conv1d(H, H, K, groups=G, stride=K).weight
    gamma, beta: (H,)      LayerNorm affine
    w_post: (H, H)         nn.Linear(H, H, bias=False).weight
    """
    B, S, H = x.shape
    K = kernel_size
    G = groups
    Hg = H // G
    s_out = S // K                              # Conv1d 'VALID' length at stride K
    out_dtype = x.dtype

    # lane-align hidden dim to 128
    h_pad = max(_round_up(H, 128), 128)

    # activation prep: truncate to s_out*K rows, zero-pad lanes, cast to bf16
    xk = x[:, : s_out * K, :]
    if h_pad != H:
        xk = jnp.pad(xk, ((0, 0), (0, 0), (0, h_pad - H)))
    xk = xk.astype(jnp.bfloat16)

    # ---------------- parameter prep (device-side, vectorized) --------------
    # GLU weight: both halves of the Linear(H, 2H) packed into one (Hp, 2Hp).
    wp = jnp.asarray(w_pre, jnp.float32)                    # (2H, H)
    wglu = jnp.zeros((h_pad, 2 * h_pad), jnp.float32)
    wglu = wglu.at[:H, :H].set(wp[:H, :].T)                 # GLU "a" half
    wglu = wglu.at[:H, h_pad:h_pad + H].set(wp[H:, :].T)    # GLU gate "b" half
    wglu = wglu.astype(jnp.bfloat16)

    # Grouped conv -> per-tap block-diagonal dense (Hp, Hp) matrices.
    # wconv[k, j, o] = conv_w[o, j % Hg, k]  iff  j and o are in the same group.
    cw_t = jnp.transpose(jnp.asarray(conv_w, jnp.float32), (2, 1, 0))  # (K, Hg, H)
    in_idx = jnp.arange(H)
    out_idx = jnp.arange(H)
    same_group = ((in_idx[:, None] // Hg) == (out_idx[None, :] // Hg))
    dense = cw_t[:, in_idx % Hg, :] * same_group[None].astype(jnp.float32)  # (K, H, H)
    wconv = jnp.zeros((K, h_pad, h_pad), jnp.float32).at[:, :H, :H].set(dense)
    wconv = wconv.astype(jnp.bfloat16)
    # TODO(synk): for large Hg (>=128) use per-group (Hg,Hg) contractions instead
    # of this dense (G-times larger) expansion.

    wpost = jnp.zeros((h_pad, h_pad), jnp.float32)
    wpost = wpost.at[:H, :H].set(jnp.asarray(w_post, jnp.float32).T)
    wpost = wpost.astype(jnp.bfloat16)

    gamma_p = jnp.zeros((1, h_pad), jnp.float32).at[0, :H].set(
        jnp.asarray(gamma, jnp.float32))
    beta_p = jnp.zeros((1, h_pad), jnp.float32).at[0, :H].set(
        jnp.asarray(beta, jnp.float32))

    # ---------------- sequence tiling ----------------------------------------
    t_s = max(1, min(seq_tile, s_out))
    n_t = pl.cdiv(s_out, t_s)

    # explicit VMEM budget: double-buffered streams + resident weights + scratch
    est = (2 * t_s * K * h_pad * 2                                  # x blocks (bf16)
           + 2 * t_s * h_pad * jnp.dtype(out_dtype).itemsize        # out blocks
           + 2 * (h_pad * 2 * h_pad + K * h_pad * h_pad + h_pad * h_pad) * 2
           + 2 * 2 * h_pad * 4                                      # gamma/beta
           + t_s * K * h_pad * 4)                                   # GLU scratch
    vmem_limit = int(min(max(2 * est, 16 * 1024 * 1024), 96 * 1024 * 1024))

    kernel = functools.partial(mxdna_kernel, kernel_size=K, h_true=H, eps=eps)

    out = pl.pallas_call(
        kernel,
        out_shape=jax.ShapeDtypeStruct((B, s_out, h_pad), out_dtype),
        grid=(B, n_t),
        in_specs=[
            pl.BlockSpec((None, t_s * K, h_pad), lambda b, t: (b, t, 0)),
            pl.BlockSpec((h_pad, 2 * h_pad), lambda b, t: (0, 0)),
            pl.BlockSpec((K, h_pad, h_pad), lambda b, t: (0, 0, 0)),
            pl.BlockSpec((1, h_pad), lambda b, t: (0, 0)),
            pl.BlockSpec((1, h_pad), lambda b, t: (0, 0)),
            pl.BlockSpec((h_pad, h_pad), lambda b, t: (0, 0)),
        ],
        out_specs=pl.BlockSpec((None, t_s, h_pad), lambda b, t: (b, t, 0)),
        scratch_shapes=[pltpu.VMEM((t_s * K, h_pad), jnp.float32)],
        compiler_params=pltpu.CompilerParams(
            dimension_semantics=("parallel", "parallel"),
            vmem_limit_bytes=vmem_limit),
    )(xk, wglu, wconv, gamma_p, beta_p, wpost)

    return out[..., :H] if h_pad != H else out


def reference_forward(x, w_pre, conv_w, gamma, beta, w_post, K, groups, eps=1e-5):
    """Pure-JAX (f32) re-statement of the PyTorch forward, for validation."""
    H = x.shape[-1]
    h = x @ w_pre.T                               # Linear(H, 2H, bias=False)
    a, b = h[..., :H], h[..., H:]
    g = a * jax.nn.sigmoid(b)                     # GLU(dim=-1)
    gc = jnp.transpose(g, (0, 2, 1))              # (B, H, S)  (NCW)
    c = jax.lax.conv_general_dilated(
        gc, conv_w, window_strides=(K,), padding="VALID",
        dimension_numbers=("NCW", "OIW", "NCW"),
        feature_group_count=groups)               # (B, H, S_out)
    c = jnp.transpose(c, (0, 2, 1))
    mean = c.mean(-1, keepdims=True)
    var = ((c - mean) ** 2).mean(-1, keepdims=True)
    y = (c - mean) / jnp.sqrt(var + eps) * gamma + beta
    y = y * jax.nn.sigmoid(y)
    return y @ w_post.T


if __name__ == "__main__":
    # small shapes consistent with the module
    B, S, H, K = 2, 16, 32, 4
    initializer_range = 0.02
    G = find_closest_factor(H, K)                 # Conv1d groups
    Hg = H // G

    key = jax.random.PRNGKey(0)
    kx, k1, k2, k3, k4, k5 = jax.random.split(key, 6)

    # deterministic parameter init (PyTorch layouts)
    w_pre = jax.random.normal(k1, (2 * H, H), jnp.float32) * 0.02       # Linear(H, 2H).weight
    conv_w = jax.random.normal(k2, (H, Hg, K), jnp.float32) * initializer_range  # Conv1d.weight
    w_post = jax.random.normal(k3, (H, H), jnp.float32) * 0.02          # Linear(H, H).weight
    gamma = 1.0 + 0.1 * jax.random.normal(k4, (H,), jnp.float32)        # LayerNorm.weight
    beta = 0.1 * jax.random.normal(k5, (H,), jnp.float32)               # LayerNorm.bias

    x = jax.random.normal(kx, (B, S, H), jnp.float32)

    out = mxdna_convnet(x, w_pre, conv_w, gamma, beta, w_post, K, G)
    out = jax.block_until_ready(out)

    ref = reference_forward(x, w_pre, conv_w, gamma, beta, w_post, K, G)
    # bf16 MXU operands (f32 accumulation) -> relaxed tolerance vs f32 reference
    np.testing.assert_allclose(np.asarray(out, np.float32), np.asarray(ref),
                               atol=3e-2, rtol=3e-2)

    print("KERNEL_OK")
</pallas_src>

<mosaic_0001>
module attributes {stable_mosaic.version = 11 : i64} {
  func.func @mxdna_kernel(%arg0: i32, %arg1: i32, %arg2: memref<1x16x128xbf16, #tpu.memory_space<vmem>>, %arg3: memref<128x256xbf16, #tpu.memory_space<vmem>>, %arg4: memref<4x128x128xbf16, #tpu.memory_space<vmem>>, %arg5: memref<1x128xf32, #tpu.memory_space<vmem>>, %arg6: memref<1x128xf32, #tpu.memory_space<vmem>>, %arg7: memref<128x128xbf16, #tpu.memory_space<vmem>>, %arg8: memref<1x4x128xf32, #tpu.memory_space<vmem>>, %arg9: memref<16x128xf32, #tpu.memory_space<vmem>>) attributes {dimension_semantics = [#tpu.dimension_semantics<parallel>, #tpu.dimension_semantics<parallel>], iteration_bounds = array<i64: 2, 1>, scalar_prefetch = 0 : i64, scratch_operands = 1 : i64, tpu.core_type = #tpu.core_type<tc>, window_params = [{transform_indices = @transform_0, window_bounds = array<i64: 1, 16, 128>}, {pipeline_mode = #tpu.pipeline_mode<synchronous>, transform_indices = @transform_1, window_bounds = array<i64: 128, 256>}, {pipeline_mode = #tpu.pipeline_mode<synchronous>, transform_indices = @transform_2, window_bounds = array<i64: 4, 128, 128>}, {pipeline_mode = #tpu.pipeline_mode<synchronous>, transform_indices = @transform_3, window_bounds = array<i64: 1, 128>}, {pipeline_mode = #tpu.pipeline_mode<synchronous>, transform_indices = @transform_4, window_bounds = array<i64: 1, 128>}, {pipeline_mode = #tpu.pipeline_mode<synchronous>, transform_indices = @transform_5, window_bounds = array<i64: 128, 128>}, {transform_indices = @transform_6, window_bounds = array<i64: 1, 4, 128>}]} {
    %c0 = arith.constant 0 : index
    %c0_0 = arith.constant 0 : index
    %c0_1 = arith.constant 0 : index
    %0 = vector.load %arg2[%c0, %c0_0, %c0_1] : memref<1x16x128xbf16, #tpu.memory_space<vmem>>, vector<1x16x128xbf16>
    %1 = vector.shape_cast %0 : vector<1x16x128xbf16> to vector<16x128xbf16>
    %c0_2 = arith.constant 0 : index
    %c0_3 = arith.constant 0 : index
    %2 = vector.load %arg3[%c0_2, %c0_3] : memref<128x256xbf16, #tpu.memory_space<vmem>>, vector<128x256xbf16>
    %cst = arith.constant dense<0.000000e+00> : vector<16x256xf32>
    %3 = tpu.matmul %1, %2, %cst {dimension_numbers = #tpu.dot_dimension_numbers<[1], [0], [0], [1], [0, 0, 1, 1], [], []>} : vector<16x128xbf16>, vector<128x256xbf16>, vector<16x256xf32> -> vector<16x256xf32>
    %4 = vector.extract_strided_slice %3 {offsets = [0, 0], sizes = [16, 128], strides = [1, 1]} : vector<16x256xf32> to vector<16x128xf32>
    %5 = vector.extract_strided_slice %3 {offsets = [0, 128], sizes = [16, 128], strides = [1, 1]} : vector<16x256xf32> to vector<16x128xf32>
    %6 = arith.negf %5 : vector<16x128xf32>
    %7 = math.exp %6 : vector<16x128xf32>
    %cst_4 = arith.constant 1.000000e+00 : f32
    %8 = vector.broadcast %cst_4 : f32 to vector<16x128xf32>
    %9 = arith.addf %8, %7 : vector<16x128xf32>
    %10 = arith.divf %8, %9 : vector<16x128xf32>
    %11 = arith.mulf %4, %10 : vector<16x128xf32>
    %c0_5 = arith.constant 0 : index
    %c0_6 = arith.constant 0 : index
    %12 = vector.load %arg9[%c0_5, %c0_6] : memref<16x128xf32, #tpu.memory_space<vmem>>, vector<16x128xf32>
    tpu.vector_store %arg9[%c0_5, %c0_6], %11 {strides = array<i32>} : memref<16x128xf32, #tpu.memory_space<vmem>>, vector<16x128xf32>,
    %cst_7 = arith.constant 0.000000e+00 : f32
    %13 = vector.broadcast %cst_7 : f32 to vector<4x128xf32>
    %c0_8 = arith.constant 0 : index
    %c0_9 = arith.constant 0 : index
    %14 = tpu.strided_load %arg9[%c0_8, %c0_9] {strides = array<i32: 4, 1>} : memref<16x128xf32, #tpu.memory_space<vmem>>, vector<4x128xf32>
    %15 = arith.truncf %14 : vector<4x128xf32> to vector<4x128xbf16>
    %c0_10 = arith.constant 0 : index
    %c0_11 = arith.constant 0 : index
    %c0_12 = arith.constant 0 : index
    %16 = vector.load %arg4[%c0_10, %c0_11, %c0_12] : memref<4x128x128xbf16, #tpu.memory_space<vmem>>, vector<1x128x128xbf16>
    %17 = vector.shape_cast %16 : vector<1x128x128xbf16> to vector<128x128xbf16>
    %cst_13 = arith.constant dense<0.000000e+00> : vector<4x128xf32>
    %18 = tpu.matmul %15, %17, %cst_13 {dimension_numbers = #tpu.dot_dimension_numbers<[1], [0], [0], [1], [0, 0, 1, 1], [], []>} : vector<4x128xbf16>, vector<128x128xbf16>, vector<4x128xf32> -> vector<4x128xf32>
    %19 = arith.addf %13, %18 : vector<4x128xf32>
    %c1 = arith.constant 1 : index
    %c0_14 = arith.constant 0 : index
    %20 = tpu.strided_load %arg9[%c1, %c0_14] {strides = array<i32: 4, 1>} : memref<16x128xf32, #tpu.memory_space<vmem>>, vector<4x128xf32>
    %21 = arith.truncf %20 : vector<4x128xf32> to vector<4x128xbf16>
    %c1_15 = arith.constant 1 : index
    %c0_16 = arith.constant 0 : index
    %c0_17 = arith.constant 0 : index
    %22 = vector.load %arg4[%c1_15, %c0_16, %c0_17] : memref<4x128x128xbf16, #tpu.memory_space<vmem>>, vector<1x128x128xbf16>
    %23 = vector.shape_cast %22 : vector<1x128x128xbf16> to vector<128x128xbf16>
    %cst_18 = arith.constant dense<0.000000e+00> : vector<4x128xf32>
    %24 = tpu.matmul %21, %23, %cst_18 {dimension_numbers = #tpu.dot_dimension_numbers<[1], [0], [0], [1], [0, 0, 1, 1], [], []>} : vector<4x128xbf16>, vector<128x128xbf16>, vector<4x128xf32> -> vector<4x128xf32>
    %25 = arith.addf %19, %24 : vector<4x128xf32>
    %c2 = arith.constant 2 : index
    %c0_19 = arith.constant 0 : index
    %26 = tpu.strided_load %arg9[%c2, %c0_19] {strides = array<i32: 4, 1>} : memref<16x128xf32, #tpu.memory_space<vmem>>, vector<4x128xf32>
    %27 = arith.truncf %26 : vector<4x128xf32> to vector<4x128xbf16>
    %c2_20 = arith.constant 2 : index
    %c0_21 = arith.constant 0 : index
    %c0_22 = arith.constant 0 : index
    %28 = vector.load %arg4[%c2_20, %c0_21, %c0_22] : memref<4x128x128xbf16, #tpu.memory_space<vmem>>, vector<1x128x128xbf16>
    %29 = vector.shape_cast %28 : vector<1x128x128xbf16> to vector<128x128xbf16>
    %cst_23 = arith.constant dense<0.000000e+00> : vector<4x128xf32>
    %30 = tpu.matmul %27, %29, %cst_23 {dimension_numbers = #tpu.dot_dimension_numbers<[1], [0], [0], [1], [0, 0, 1, 1], [], []>} : vector<4x128xbf16>, vector<128x128xbf16>, vector<4x128xf32> -> vector<4x128xf32>
    %31 = arith.addf %25, %30 : vector<4x128xf32>
    %c3 = arith.constant 3 : index
    %c0_24 = arith.constant 0 : index
    %32 = tpu.strided_load %arg9[%c3, %c0_24] {strides = array<i32: 4, 1>} : memref<16x128xf32, #tpu.memory_space<vmem>>, vector<4x128xf32>
    %33 = arith.truncf %32 : vector<4x128xf32> to vector<4x128xbf16>
    %c3_25 = arith.constant 3 : index
    %c0_26 = arith.constant 0 : index
    %c0_27 = arith.constant 0 : index
    %34 = vector.load %arg4[%c3_25, %c0_26, %c0_27] : memref<4x128x128xbf16, #tpu.memory_space<vmem>>, vector<1x128x128xbf16>
    %35 = vector.shape_cast %34 : vector<1x128x128xbf16> to vector<128x128xbf16>
    %cst_28 = arith.constant dense<0.000000e+00> : vector<4x128xf32>
    %36 = tpu.matmul %33, %35, %cst_28 {dimension_numbers = #tpu.dot_dimension_numbers<[1], [0], [0], [1], [0, 0, 1, 1], [], []>} : vector<4x128xbf16>, vector<128x128xbf16>, vector<4x128xf32> -> vector<4x128xf32>
    %37 = arith.addf %31, %36 : vector<4x128xf32>
    %cst_29 = arith.constant dense<0.000000e+00> : vector<4xf32>
    %38 = vector.multi_reduction <add>, %37, %cst_29 [1] : vector<4x128xf32> to vector<4xf32>
    %39 = vector.shape_cast %38 : vector<4xf32> to vector<4x1xf32>
    %cst_30 = arith.constant 3.125000e-02 : f32
    %40 = vector.broadcast %cst_30 : f32 to vector<4x1xf32>
    %41 = arith.mulf %39, %40 : vector<4x1xf32>
    %42 = arith.mulf %37, %37 : vector<4x128xf32>
    %cst_31 = arith.constant dense<0.000000e+00> : vector<4xf32>
    %43 = vector.multi_reduction <add>, %42, %cst_31 [1] : vector<4x128xf32> to vector<4xf32>
    %44 = vector.shape_cast %43 : vector<4xf32> to vector<4x1xf32>
    %cst_32 = arith.constant 3.125000e-02 : f32
    %45 = vector.broadcast %cst_32 : f32 to vector<4x1xf32>
    %46 = arith.mulf %44, %45 : vector<4x1xf32>
    %47 = arith.mulf %41, %41 : vector<4x1xf32>
    %48 = arith.subf %46, %47 : vector<4x1xf32>
    %49 = vector.broadcast %41 : vector<4x1xf32> to vector<4x128xf32>
    %50 = arith.subf %37, %49 : vector<4x128xf32>
    %cst_33 = arith.constant 9.99999974E-6 : f32
    %51 = vector.broadcast %cst_33 : f32 to vector<4x1xf32>
    %52 = arith.addf %48, %51 : vector<4x1xf32>
    %53 = math.rsqrt %52 : vector<4x1xf32>
    %54 = vector.broadcast %53 : vector<4x1xf32> to vector<4x128xf32>
    %55 = arith.mulf %50, %54 : vector<4x128xf32>
    %c0_34 = arith.constant 0 : index
    %c0_35 = arith.constant 0 : index
    %56 = vector.load %arg5[%c0_34, %c0_35] : memref<1x128xf32, #tpu.memory_space<vmem>>, vector<1x128xf32>
    %57 = vector.broadcast %56 : vector<1x128xf32> to vector<4x128xf32>
    %58 = arith.mulf %55, %57 : vector<4x128xf32>
    %c0_36 = arith.constant 0 : index
    %c0_37 = arith.constant 0 : index
    %59 = vector.load %arg6[%c0_36, %c0_37] : memref<1x128xf32, #tpu.memory_space<vmem>>, vector<1x128xf32>
    %60 = vector.broadcast %59 : vector<1x128xf32> to vector<4x128xf32>
    %61 = arith.addf %58, %60 : vector<4x128xf32>
    %62 = arith.negf %61 : vector<4x128xf32>
    %63 = math.exp %62 : vector<4x128xf32>
    %cst_38 = arith.constant 1.000000e+00 : f32
    %64 = vector.broadcast %cst_38 : f32 to vector<4x128xf32>
    %65 = arith.addf %64, %63 : vector<4x128xf32>
    %66 = arith.divf %64, %65 : vector<4x128xf32>
    %67 = arith.mulf %61, %66 : vector<4x128xf32>
    %68 = arith.truncf %67 : vector<4x128xf32> to vector<4x128xbf16>
    %c0_39 = arith.constant 0 : index
    %c0_40 = arith.constant 0 : index
    %69 = vector.load %arg7[%c0_39, %c0_40] : memref<128x128xbf16, #tpu.memory_space<vmem>>, vector<128x128xbf16>
    %cst_41 = arith.constant dense<0.000000e+00> : vector<4x128xf32>
    %70 = tpu.matmul %68, %69, %cst_41 {dimension_numbers = #tpu.dot_dimension_numbers<[1], [0], [0], [1], [0, 0, 1, 1], [], []>} : vector<4x128xbf16>, vector<128x128xbf16>, vector<4x128xf32> -> vector<4x128xf32>
    %c0_42 = arith.constant 0 : index
    %c0_43 = arith.constant 0 : index
    %c0_44 = arith.constant 0 : index
    %71 = vector.load %arg8[%c0_42, %c0_43, %c0_44] : memref<1x4x128xf32, #tpu.memory_space<vmem>>, vector<1x4x128xf32>
    %72 = vector.shape_cast %71 : vector<1x4x128xf32> to vector<4x128xf32>
    %73 = vector.shape_cast %70 : vector<4x128xf32> to vector<1x4x128xf32>
    tpu.vector_store %arg8[%c0_42, %c0_43, %c0_44], %73 {strides = array<i32>} : memref<1x4x128xf32, #tpu.memory_space<vmem>>, vector<1x4x128xf32>,
    return
  }
  func.func @transform_0(%arg0: i32, %arg1: i32) -> (i32, i32, i32) {
    %c0_i32 = arith.constant 0 : i32
    %c0_i32_0 = arith.constant 0 : i32
    return %arg0, %arg1, %c0_i32 : i32, i32, i32
  }
  func.func @transform_1(%arg0: i32, %arg1: i32) -> (i32, i32) {
    %c0_i32 = arith.constant 0 : i32
    %c0_i32_0 = arith.constant 0 : i32
    %c0_i32_1 = arith.constant 0 : i32
    return %c0_i32, %c0_i32_0 : i32, i32
  }
  func.func @transform_2(%arg0: i32, %arg1: i32) -> (i32, i32, i32) {
    %c0_i32 = arith.constant 0 : i32
    %c0_i32_0 = arith.constant 0 : i32
    %c0_i32_1 = arith.constant 0 : i32
    %c0_i32_2 = arith.constant 0 : i32
    return %c0_i32, %c0_i32_0, %c0_i32_1 : i32, i32, i32
  }
  func.func @transform_3(%arg0: i32, %arg1: i32) -> (i32, i32) {
    %c0_i32 = arith.constant 0 : i32
    %c0_i32_0 = arith.constant 0 : i32
    %c0_i32_1 = arith.constant 0 : i32
    return %c0_i32, %c0_i32_0 : i32, i32
  }
  func.func @transform_4(%arg0: i32, %arg1: i32) -> (i32, i32) {
    %c0_i32 = arith.constant 0 : i32
    %c0_i32_0 = arith.constant 0 : i32
    %c0_i32_1 = arith.constant 0 : i32
    return %c0_i32, %c0_i32_0 : i32, i32
  }
  func.func @transform_5(%arg0: i32, %arg1: i32) -> (i32, i32) {
    %c0_i32 = arith.constant 0 : i32
    %c0_i32_0 = arith.constant 0 : i32
    %c0_i32_1 = arith.constant 0 : i32
    return %c0_i32, %c0_i32_0 : i32, i32
  }
  func.func @transform_6(%arg0: i32, %arg1: i32) -> (i32, i32, i32) {
    %c0_i32 = arith.constant 0 : i32
    %c0_i32_0 = arith.constant 0 : i32
    return %arg0, %arg1, %c0_i32 : i32, i32, i32
  }
}

</mosaic_0001>

<llo_original>
// kernel: tpu_custom_call.1
$region0: #{tpu_custom_call.1}
  #allocation0 [shape = 'u32[]', space=smem, size = 0x4, offset = 0x4, fixed_abs, tag = 'smem constant byte address 0x4 - core index']
  #allocation1 [shape = 'u32[144,128]{1,0:T(1,128)}', space=vmem, size = 0x12000, scoped, tag = 'internal scratch']
  #allocation2 [shape = 'f32[16,128]{1,0:T(8,128)}', space=vmem, size = 0x2000, scoped, tag = 'scratch operand']
  %s0 = inlined_call_operand.hbm [shape: bf16[2,16,128], index: 0, kind: input, shape index: {}]
  %s1 = inlined_call_operand.hbm [shape: bf16[128,256], index: 1, kind: input, shape index: {}]
  %s2 = inlined_call_operand.hbm [shape: bf16[4,128,128], index: 2, kind: input, shape index: {}]
  %s3 = inlined_call_operand.vmem [shape: f32[1,128], index: 3, kind: input, shape index: {}]
  %s4 = inlined_call_operand.vmem [shape: f32[1,128], index: 4, kind: input, shape index: {}]
  %s5 = inlined_call_operand.hbm [shape: bf16[128,128], index: 5, kind: input, shape index: {}]
  %s6 = inlined_call_operand.hbm [shape: f32[2,4,128], index: 6, kind: output, shape index: {}]
  %s7 = sld [smem:[#allocation0]]
  $region73: #{tpu_custom_call.1} parent=0
    _
  %s9 = ssub.s32 1, %s7
  %s10 = scalar_select 0, %s9, %s7
  $region1: #{tpu_custom_call.1} parent=0
    #allocation3 [shape = 'u8[8192]{0}', space=vmem, size = 0x2000, scoped, tag = 'input window, operand 0']
    #allocation4 [shape = 's32[2]{0}', space=sflag, size = 0x8, scoped, tag = 'scoped memory for tpu_custom_call.1']
    #allocation5 [shape = 's32[2]{0}', space=sflag, size = 0x8, scoped, tag = 'scoped memory for tpu_custom_call.1']
    #allocation6 [shape = 'u8[65536]{0}', space=vmem, size = 0x10000, scoped, tag = 'input window, operand 1, single buffered']
    #allocation7 [shape = 's32[1]{0}', space=sflag, size = 0x4, scoped, tag = 'scoped memory for tpu_custom_call.1']
    #allocation8 [shape = 'u8[131072]{0}', space=vmem, size = 0x20000, scoped, tag = 'input window, operand 2, single buffered']
    #allocation9 [shape = 'u8[32768]{0}', space=vmem, size = 0x8000, scoped, tag = 'input window, operand 5, single buffered']
    #allocation10 [shape = 's32[1]{0}', space=sflag, size = 0x4, scoped, tag = 'scoped memory for tpu_custom_call.1']
    #allocation11 [shape = 'u8[4096]{0}', space=vmem, size = 0x1000, scoped, tag = 'output window, operand 0']
    %11 = vsyncpa [#allocation4], 0
    %s12 = scalar_lea.sflag [#allocation4], 1
    %13 = vsyncpa %s12, 0
    %14 = vsyncpa [#allocation7], 0
    %15 = vsyncpa [#allocation10], 0
    %16 = vsyncpa [#allocation5], 0
    %s17 = scalar_lea.sflag [#allocation5], 1
    %18 = vsyncpa %s17, 0
    loop: start=0, step=1, limit=4
    $region2: #{tpu_custom_call.1} parent=1 // loop_pre_header
      _
    $region3: #{tpu_custom_call.1} parent=1 // loop_header
      %s20 = sphi 0, %s24
      %p21 = scmp.ge.s32.totalorder %s20, 4
      %s27 = sphi 0, %s39
      %s28 = sphi 0, %s35
      %s29 = sphi 0, %s27
      %s30 = sphi 0, %s28
      %s31 = sphi 0, %s29
      %s32 = sphi 0, %s30
      %s44 = sphi 0, %s46
      %s47 = sphi 0, %s44
      %s48 = sphi 0, %s47
      %s64 = sphi 0, %s48
      %s68 = sphi 0, %s68
      %s70 = sphi 0, %s68
      %s71 = sphi 0, %s70
      %s85 = sphi 0, %s71
      %s89 = sphi 0, %s89
      %s91 = sphi 0, %s89
      %s92 = sphi 0, %s91
      %s106 = sphi 0, %s92
      %s110 = sphi 0, %s110
      %s112 = sphi 0, %s110
      %s113 = sphi 0, %s112
      %s127 = sphi 0, %s113
      %s131 = sphi 0, %s131
      %s133 = sphi 0, %s131
      %s134 = sphi 0, %s133
      %s148 = sphi 0, %s134
      %s152 = sphi 0, %s152
      %s154 = sphi 0, %s152
      %s155 = sphi 0, %s154
      %s169 = sphi 0, %s155
      %s177 = sphi 0, %s179
      %s180 = sphi 0, %s177
      %s181 = sphi 0, %s180
      %s197 = sphi 0, %s181
    $region4: #{tpu_custom_call.1} parent=1 // loop_header_branch
      %23 = sbr.rel (%p21) target = $region8
    $region5: #{tpu_custom_call.1} parent=1 // loop_body
      %s25 = ssub.s32 %s20, 1
      %s26 = ssub.s32 %s20, 2
      %s33 = sadd.s32 1, %s28
      %p34 = scmp.ge.s32.totalorder %s33, 1
      %s35 = scalar_select %p34, 0, %s33
      %s36 = sadd.s32 1, %s27
      %s37 = scalar_select %p34, %s36, %s27
      %p38 = scmp.ge.s32.totalorder %s37, 2
      %s39 = scalar_select %p38, 0, %s37
      %s40 = ssub.s32 %s27, %s39
      %s41 = ssub.s32 %s28, %s35
      %s42 = sor.u32 %s40, %s41
      %p43 = scmp.eq.s32.totalorder %s42, 0
      %s45 = sadd.s32 %s44, 1
      %s46 = scalar_select %p43, %s44, %s45
      %p49 = pneg %p43
      %p50 = scmp.eq.s32.totalorder %s20, 1
      %p51 = por %p49, %p50
      %p52 = scmp.ne.s32.totalorder %s44, %s47
      %p53 = scmp.eq.s32.totalorder %s20, 0
      %p54 = por %p52, %p53
      %p55 = scmp.ne.s32.totalorder %s44, %s47
      %p56 = scmp.eq.s32.totalorder %s25, 1
      %p57 = por %p55, %p56
      %p58 = scmp.ne.s32.totalorder %s47, %s48
      %p59 = scmp.eq.s32.totalorder %s25, 0
      %p60 = por %p58, %p59
      %p61 = scmp.ne.s32.totalorder %s47, %s48
      %p62 = scmp.eq.s32.totalorder %s26, 1
      %p63 = por %p61, %p62
      %p65 = scmp.ne.s32.totalorder %s48, %s64
      %p66 = scmp.eq.s32.totalorder %s26, 0
      %p67 = por %p65, %p66
      %s69 = sadd.s32 %s68, 1
      %p72 = scmp.eq.s32.totalorder %s20, 1
      %p73 = scmp.ne.s32.totalorder %s68, %s70
      %p74 = scmp.eq.s32.totalorder %s20, 0
      %p75 = por %p73, %p74
      %p76 = scmp.ne.s32.totalorder %s68, %s70
      %p77 = scmp.eq.s32.totalorder %s25, 1
      %p78 = por %p76, %p77
      %p79 = scmp.ne.s32.totalorder %s70, %s71
      %p80 = scmp.eq.s32.totalorder %s25, 0
      %p81 = por %p79, %p80
      %p82 = scmp.ne.s32.totalorder %s70, %s71
      %p83 = scmp.eq.s32.totalorder %s26, 1
      %p84 = por %p82, %p83
      %p86 = scmp.ne.s32.totalorder %s71, %s85
      %p87 = scmp.eq.s32.totalorder %s26, 0
      %p88 = por %p86, %p87
      %s90 = sadd.s32 %s89, 1
      %p93 = scmp.eq.s32.totalorder %s20, 1
      %p94 = scmp.ne.s32.totalorder %s89, %s91
      %p95 = scmp.eq.s32.totalorder %s20, 0
      %p96 = por %p94, %p95
      %p97 = scmp.ne.s32.totalorder %s89, %s91
      %p98 = scmp.eq.s32.totalorder %s25, 1
      %p99 = por %p97, %p98
      %p100 = scmp.ne.s32.totalorder %s91, %s92
      %p101 = scmp.eq.s32.totalorder %s25, 0
      %p102 = por %p100, %p101
      %p103 = scmp.ne.s32.totalorder %s91, %s92
      %p104 = scmp.eq.s32.totalorder %s26, 1
      %p105 = por %p103, %p104
      %p107 = scmp.ne.s32.totalorder %s92, %s106
      %p108 = scmp.eq.s32.totalorder %s26, 0
      %p109 = por %p107, %p108
      %s111 = sadd.s32 %s110, 1
      %p114 = scmp.eq.s32.totalorder %s20, 1
      %p115 = scmp.ne.s32.totalorder %s110, %s112
      %p116 = scmp.eq.s32.totalorder %s20, 0
      %p117 = por %p115, %p116
      %p118 = scmp.ne.s32.totalorder %s110, %s112
      %p119 = scmp.eq.s32.totalorder %s25, 1
      %p120 = por %p118, %p119
      %p121 = scmp.ne.s32.totalorder %s112, %s113
      %p122 = scmp.eq.s32.totalorder %s25, 0
      %p123 = por %p121, %p122
      %p124 = scmp.ne.s32.totalorder %s112, %s113
      %p125 = scmp.eq.s32.totalorder %s26, 1
      %p126 = por %p124, %p125
      %p128 = scmp.ne.s32.totalorder %s113, %s127
      %p129 = scmp.eq.s32.totalorder %s26, 0
      %p130 = por %p128, %p129
      %s132 = sadd.s32 %s131, 1
      %p135 = scmp.eq.s32.totalorder %s20, 1
      %p136 = scmp.ne.s32.totalorder %s131, %s133
      %p137 = scmp.eq.s32.totalorder %s20, 0
      %p138 = por %p136, %p137
      %p139 = scmp.ne.s32.totalorder %s131, %s133
      %p140 = scmp.eq.s32.totalorder %s25, 1
      %p141 = por %p139, %p140
      %p142 = scmp.ne.s32.totalorder %s133, %s134
      %p143 = scmp.eq.s32.totalorder %s25, 0
      %p144 = por %p142, %p143
      %p145 = scmp.ne.s32.totalorder %s133, %s134
      %p146 = scmp.eq.s32.totalorder %s26, 1
      %p147 = por %p145, %p146
      %p149 = scmp.ne.s32.totalorder %s134, %s148
      %p150 = scmp.eq.s32.totalorder %s26, 0
      %p151 = por %p149, %p150
      %s153 = sadd.s32 %s152, 1
      %p156 = scmp.eq.s32.totalorder %s20, 1
      %p157 = scmp.ne.s32.totalorder %s152, %s154
      %p158 = scmp.eq.s32.totalorder %s20, 0
      %p159 = por %p157, %p158
      %p160 = scmp.ne.s32.totalorder %s152, %s154
      %p161 = scmp.eq.s32.totalorder %s25, 1
      %p162 = por %p160, %p161
      %p163 = scmp.ne.s32.totalorder %s154, %s155
      %p164 = scmp.eq.s32.totalorder %s25, 0
      %p165 = por %p163, %p164
      %p166 = scmp.ne.s32.totalorder %s154, %s155
      %p167 = scmp.eq.s32.totalorder %s26, 1
      %p168 = por %p166, %p167
      %p170 = scmp.ne.s32.totalorder %s155, %s169
      %p171 = scmp.eq.s32.totalorder %s26, 0
      %p172 = por %p170, %p171
      %s173 = ssub.s32 %s27, %s39
      %s174 = ssub.s32 %s28, %s35
      %s175 = sor.u32 %s173, %s174
      %p176 = scmp.eq.s32.totalorder %s175, 0
      %s178 = sadd.s32 %s177, 1
      %s179 = scalar_select %p176, %s177, %s178
      %p182 = pneg %p176
      %p183 = scmp.eq.s32.totalorder %s20, 1
      %p184 = por %p182, %p183
      %p185 = scmp.ne.s32.totalorder %s177, %s180
      %p186 = scmp.eq.s32.totalorder %s20, 0
      %p187 = por %p185, %p186
      %p188 = scmp.ne.s32.totalorder %s177, %s180
      %p189 = scmp.eq.s32.totalorder %s25, 1
      %p190 = por %p188, %p189
      %p191 = scmp.ne.s32.totalorder %s180, %s181
      %p192 = scmp.eq.s32.totalorder %s25, 0
      %p193 = por %p191, %p192
      %p194 = scmp.ne.s32.totalorder %s180, %s181
      %p195 = scmp.eq.s32.totalorder %s26, 1
      %p196 = por %p194, %p195
      %p198 = scmp.ne.s32.totalorder %s181, %s197
      %p199 = scmp.eq.s32.totalorder %s26, 0
      %p200 = por %p198, %p199
      %p201 = scmp.le.s32.totalorder 1, %s20
      %p202 = scmp.lt.s32.totalorder %s20, 3
      %p203 = pnand %p201, %p202
      %p204 = pneg %p203
      // Predicated region
      $region9: #{tpu_custom_call.1} parent=5 // pred_check
        _
      $region10: #{tpu_custom_call.1} parent=5 // pred_check_branch
        %206 = sbr.rel (%p203) target = $region12
      $region11: #{tpu_custom_call.1} parent=5 // pred_region
        %s207 = ssub.s32 %s20, 1
        // Predicated region
        $region13: #{tpu_custom_call.1} parent=11 // pred_check
          %p208 = pneg %p81
        $region14: #{tpu_custom_call.1} parent=11 // pred_check_branch
          %210 = sbr.rel (%p208) target = $region16
        $region15: #{tpu_custom_call.1} parent=11 // pred_region
          %s212 = ssub.s32 2048, 2048
          %213 = vsyncadd [#allocation7], %s212
          %s214 = sshll.u32 [#allocation6], 4
          %s215 = int_to_ptr.vmem [resolvable:$true] %s214
          %220 = dma.hbm_to_vmem [thread:$0]  %s1, 2048, %s215, [#allocation7], 128, 128, 8
        $region16: #{tpu_custom_call.1} parent=11 // pred_fallthru
          _
        // Predicated region
        $region17: #{tpu_custom_call.1} parent=11 // pred_check
          %p221 = pneg %p102
        $region18: #{tpu_custom_call.1} parent=11 // pred_check_branch
          %223 = sbr.rel (%p221) target = $region20
        $region19: #{tpu_custom_call.1} parent=11 // pred_region
          %s225 = ssub.s32 4096, 4096
          %226 = vsyncadd [#allocation7], %s225
          %s227 = sshll.u32 [#allocation8], 4
          %s228 = int_to_ptr.vmem [resolvable:$true] %s227
          %233 = dma.hbm_to_vmem [thread:$0]  %s2, 4096, %s228, [#allocation7], 64, 64, 4
        $region20: #{tpu_custom_call.1} parent=11 // pred_fallthru
          _
        // Predicated region
        $region21: #{tpu_custom_call.1} parent=11 // pred_check
          %p234 = pneg %p123
        $region22: #{tpu_custom_call.1} parent=11 // pred_check_branch
          %236 = sbr.rel (%p234) target = $region24
        $region23: #{tpu_custom_call.1} parent=11 // pred_region
          _
        $region24: #{tpu_custom_call.1} parent=11 // pred_fallthru
          _
        // Predicated region
        $region25: #{tpu_custom_call.1} parent=11 // pred_check
          %p237 = pneg %p144
        $region26: #{tpu_custom_call.1} parent=11 // pred_check_branch
          %239 = sbr.rel (%p237) target = $region28
        $region27: #{tpu_custom_call.1} parent=11 // pred_region
          _
        $region28: #{tpu_custom_call.1} parent=11 // pred_fallthru
          _
        // Predicated region
        $region29: #{tpu_custom_call.1} parent=11 // pred_check
          %p240 = pneg %p165
        $region30: #{tpu_custom_call.1} parent=11 // pred_check_branch
          %242 = sbr.rel (%p240) target = $region32
        $region31: #{tpu_custom_call.1} parent=11 // pred_region
          %s244 = ssub.s32 1024, 1024
          %245 = vsyncadd [#allocation10], %s244
          %s246 = sshll.u32 [#allocation9], 4
          %s247 = int_to_ptr.vmem [resolvable:$true] %s246
          %252 = dma.hbm_to_vmem [thread:$0]  %s5, 1024, %s247, [#allocation10], 64, 64, 4
        $region32: #{tpu_custom_call.1} parent=11 // pred_fallthru
          _
      $region12: #{tpu_custom_call.1} parent=5 // pred_fallthru
        _
      %p253 = scmp.lt.s32.totalorder %s20, 2
      // Predicated region
      $region33: #{tpu_custom_call.1} parent=5 // pred_check
        %p254 = pneg %p253
      $region34: #{tpu_custom_call.1} parent=5 // pred_check_branch
        %256 = sbr.rel (%p254) target = $region36
      $region35: #{tpu_custom_call.1} parent=5 // pred_region
        // Predicated region
        $region37: #{tpu_custom_call.1} parent=35 // pred_check
          %p257 = pneg %p54
        $region38: #{tpu_custom_call.1} parent=35 // pred_check_branch
          %259 = sbr.rel (%p257) target = $region40
        $region39: #{tpu_custom_call.1} parent=35 // pred_region
          %s260 = sand.u32 %s44, 1
          %s261 = scalar_lea.sflag [#allocation4], %s260
          %s262 = sand.u32 %s44, 1
          %s263 = smul.addr %s262, 8
          %s264 = scalar_lea.vmem [#allocation3], %s263
          %s265 = smul.u32 2, %s28
          %s267 = ssub.s32 128, 128
          %268 = vsyncadd %s261, %s267
          %s269 = smul.addr %s27, 2
          %s270 = sadd.s32 %s265, %s269
          %s271 = smul.addr %s270, 64
          %s272 = scalar_lea.hbm %s0, %s271
          %s273 = sshll.u32 %s264, 4
          %s274 = int_to_ptr.vmem [resolvable:$true] %s273
          %279 = dma.hbm_to_vmem [thread:$0]  %s272, 128, %s274, %s261, 64, 64, 4
        $region40: #{tpu_custom_call.1} parent=35 // pred_fallthru
          _
      $region36: #{tpu_custom_call.1} parent=5 // pred_fallthru
        _
      %p280 = scmp.le.s32.totalorder 1, %s20
      %p281 = scmp.lt.s32.totalorder %s20, 3
      %p282 = pnand %p280, %p281
      %p283 = pneg %p282
      // Predicated region
      $region41: #{tpu_custom_call.1} parent=5 // pred_check
        _
      $region42: #{tpu_custom_call.1} parent=5 // pred_check_branch
        %285 = sbr.rel (%p282) target = $region44
      $region43: #{tpu_custom_call.1} parent=5 // pred_region
        %s286 = ssub.s32 %s20, 1
        %s287 = sand.u32 %s47, 1
        %s288 = scalar_lea.sflag [#allocation4], %s287
        %s289 = sand.u32 %s47, 1
        %s290 = smul.addr %s289, 8
        %s291 = scalar_lea.vmem [#allocation3], %s290
        // Predicated region
        $region45: #{tpu_custom_call.1} parent=43 // pred_check
          %p292 = pneg %p60
        $region46: #{tpu_custom_call.1} parent=43 // pred_check_branch
          %294 = sbr.rel (%p292) target = $region48
        $region47: #{tpu_custom_call.1} parent=43 // pred_region
          %295 = dma.done %s288, 128
        $region48: #{tpu_custom_call.1} parent=43 // pred_fallthru
          _
        // Predicated region
        $region49: #{tpu_custom_call.1} parent=43 // pred_check
          %p296 = pneg %p81
        $region50: #{tpu_custom_call.1} parent=43 // pred_check_branch
          %298 = sbr.rel (%p296) target = $region52
        $region51: #{tpu_custom_call.1} parent=43 // pred_region
          %299 = dma.done [#allocation7], 2048
        $region52: #{tpu_custom_call.1} parent=43 // pred_fallthru
          _
        // Predicated region
        $region53: #{tpu_custom_call.1} parent=43 // pred_check
          %p300 = pneg %p102
        $region54: #{tpu_custom_call.1} parent=43 // pred_check_branch
          %302 = sbr.rel (%p300) target = $region56
        $region55: #{tpu_custom_call.1} parent=43 // pred_region
          %303 = dma.done [#allocation7], 4096
        $region56: #{tpu_custom_call.1} parent=43 // pred_fallthru
          _
        // Predicated region
        $region57: #{tpu_custom_call.1} parent=43 // pred_check
          %p304 = pneg %p165
        $region58: #{tpu_custom_call.1} parent=43 // pred_check_branch
          %306 = sbr.rel (%p304) target = $region60
        $region59: #{tpu_custom_call.1} parent=43 // pred_region
          %307 = dma.done [#allocation10], 1024
        $region60: #{tpu_custom_call.1} parent=43 // pred_fallthru
          _
        %s308 = sand.u32 %s47, 1
        %s309 = scalar_lea.sflag [#allocation4], %s308
        %s310 = sand.u32 %s47, 1
        %s311 = smul.addr %s310, 8
        %s312 = scalar_lea.vmem [#allocation3], %s311
        %p313 = pneg %p60
        %p314 = pneg %p57
        %p315 = pneg %p81
        %p316 = pneg %p78
        %p317 = pneg %p102
        %p318 = pneg %p99
        %p319 = pneg %p123
        %p320 = pneg %p120
        %p321 = pneg %p144
        %p322 = pneg %p141
        %p323 = pneg %p165
        %p324 = pneg %p162
        %p325 = pneg %p193
        %p326 = pneg %p190
        %s327 = sand.u32 %s180, 1
        %s328 = scalar_lea.sflag [#allocation5], %s327
        %s329 = sand.u32 %s180, 1
        %s330 = smul.addr %s329, 4
        %s331 = scalar_lea.vmem [#allocation11], %s330
        %s332 = smul.u32 2, %s30
        %v334 = vld [vmem:[%s291] sm:$0xf]
        %v335 = vld [vmem:[%s291 + $0x4] sm:$0xf]
        %v336 = vld [vmem:[#allocation6] sm:$0xff]
        %v337 = vld [vmem:[#allocation6 + $0x8] sm:$0xff]
        %v338 = vld [vmem:[#allocation6 + $0x10] sm:$0xff]
        %v339 = vld [vmem:[#allocation6 + $0x18] sm:$0xff]
        %v340 = vld [vmem:[#allocation6 + $0x20] sm:$0xff]
        %v341 = vld [vmem:[#allocation6 + $0x28] sm:$0xff]
        %v342 = vld [vmem:[#allocation6 + $0x30] sm:$0xff]
        %v343 = vld [vmem:[#allocation6 + $0x38] sm:$0xff]
        %v344 = vld [vmem:[#allocation6 + $0x40] sm:$0xff]
        %v345 = vld [vmem:[#allocation6 + $0x48] sm:$0xff]
        %v346 = vld [vmem:[#allocation6 + $0x50] sm:$0xff]
        %v347 = vld [vmem:[#allocation6 + $0x58] sm:$0xff]
        %v348 = vld [vmem:[#allocation6 + $0x60] sm:$0xff]
        %v349 = vld [vmem:[#allocation6 + $0x68] sm:$0xff]
        %v350 = vld [vmem:[#allocation6 + $0x70] sm:$0xff]
        %v351 = vld [vmem:[#allocation6 + $0x78] sm:$0xff]
        %v354 = vunpack.c.l.b16 %v334
        %v355 = vunpack.c.l.b16 %v335
        %v356 = vpack.c.b16 %v355, %v354
        %v374 = vunpack.c.l.b16 %v336
        %v375 = vunpack.c.h.b16 %v336
        %v376 = vunpack.c.l.b16 %v337
        %v377 = vunpack.c.h.b16 %v337
        %v378 = vunpack.c.l.b16 %v338
        %v379 = vunpack.c.h.b16 %v338
        %v380 = vunpack.c.l.b16 %v339
        %v381 = vunpack.c.h.b16 %v339
        %v382 = vunpack.c.l.b16 %v340
        %v383 = vunpack.c.h.b16 %v340
        %v384 = vunpack.c.l.b16 %v341
        %v385 = vunpack.c.h.b16 %v341
        %v386 = vunpack.c.l.b16 %v342
        %v387 = vunpack.c.h.b16 %v342
        %v388 = vunpack.c.l.b16 %v343
        %v389 = vunpack.c.h.b16 %v343
        %v390 = vunpack.c.l.b16 %v344
        %v391 = vunpack.c.h.b16 %v344
        %v392 = vunpack.c.l.b16 %v345
        %v393 = vunpack.c.h.b16 %v345
        %v394 = vunpack.c.l.b16 %v346
        %v395 = vunpack.c.h.b16 %v346
        %v396 = vunpack.c.l.b16 %v347
        %v397 = vunpack.c.h.b16 %v347
        %v398 = vunpack.c.l.b16 %v348
        %v399 = vunpack.c.h.b16 %v348
        %v400 = vunpack.c.l.b16 %v349
        %v401 = vunpack.c.h.b16 %v349
        %v402 = vunpack.c.l.b16 %v350
        %v403 = vunpack.c.h.b16 %v350
        %v404 = vunpack.c.l.b16 %v351
        %v405 = vunpack.c.h.b16 %v351
        %v406 = vpack.c.b16 %v376, %v374
        %v407 = vpack.c.b16 %v377, %v375
        %v408 = vpack.c.b16 %v380, %v378
        %v409 = vpack.c.b16 %v381, %v379
        %v410 = vpack.c.b16 %v384, %v382
        %v411 = vpack.c.b16 %v385, %v383
        %v412 = vpack.c.b16 %v388, %v386
        %v413 = vpack.c.b16 %v389, %v387
        %v414 = vpack.c.b16 %v392, %v390
        %v415 = vpack.c.b16 %v393, %v391
        %v416 = vpack.c.b16 %v396, %v394
        %v417 = vpack.c.b16 %v397, %v395
        %v418 = vpack.c.b16 %v400, %v398
        %v419 = vpack.c.b16 %v401, %v399
        %v420 = vpack.c.b16 %v404, %v402
        %v421 = vpack.c.b16 %v405, %v403
        %438 = vmatprep.subr.bf16.mxu0 %v407
        %439 = vmatpush1.bf16.msra.mxu0 %v406
        %440 = vmatprep.subr.bf16.mxu0 %v409
        %441 = vmatpush1.bf16.msra.mxu0 %v408
        %442 = vmatprep.subr.bf16.mxu0 %v411
        %443 = vmatpush1.bf16.msra.mxu0 %v410
        %444 = vmatprep.subr.bf16.mxu0 %v413
        %445 = vmatpush1.bf16.msra.mxu0 %v412
        %446 = vmatprep.subr.bf16.mxu0 %v415
        %447 = vmatpush1.bf16.msra.mxu0 %v414
        %448 = vmatprep.subr.bf16.mxu0 %v417
        %449 = vmatpush1.bf16.msra.mxu0 %v416
        %450 = vmatprep.subr.bf16.mxu0 %v419
        %451 = vmatpush1.bf16.msra.mxu0 %v418
        %452 = vmatprep.subr.bf16.mxu0 %v421
        %453 = vmatpush1.bf16.msra.mxu0 %v420
        %454 = vmatprep.subr.bf16.mxu0 0
        %455 = vmatpush1.bf16.msra.mxu0 0
        %456 = vmatprep.subr.bf16.mxu0 0
        %457 = vmatpush1.bf16.msra.mxu0 0
        %458 = vmatprep.subr.bf16.mxu0 0
        %459 = vmatpush1.bf16.msra.mxu0 0
        %460 = vmatprep.subr.bf16.mxu0 0
        %461 = vmatpush1.bf16.msra.mxu0 0
        %462 = vmatprep.subr.bf16.mxu0 0
        %463 = vmatpush1.bf16.msra.mxu0 0
        %464 = vmatprep.subr.bf16.mxu0 0
        %465 = vmatpush1.bf16.msra.mxu0 0
        %466 = vmatprep.subr.bf16.mxu0 0
        %467 = vmatpush1.bf16.msra.mxu0 0
        %468 = vmatprep.subr.bf16.mxu0 0
        %469 = vmatpush1.bf16.msra.mxu0 0
        %470 = vmatprep.mubr.bf16.mxu0 0
        %471 = vmatmul.mubr.bf16.gmra.mrb[0].mxu0 %v356
        %v472 = vpop.f32.mrb[0].mxu0
        %v473 = vadd.f32 0.0, %v472
        %v474 = vpop.f32.mrb[0].mxu0
        %v475 = vadd.f32 0.0, %v474
        %v476 = vpop.f32.mrb[0].mxu0
        %v477 = vadd.f32 0.0, %v476
        %v478 = vpop.f32.mrb[0].mxu0
        %v479 = vadd.f32 0.0, %v478
        %480 = vdwg.mxu0
        %v481 = vxor.u32 %v475, 2147483648
        %v482 = vxor.u32 %v479, 2147483648
        %v483 = vmul.f32 %v481, 1.442695
        %v484 = vpow.pop %v483
        %v485 = vmul.f32 %v482, 1.442695
        %v486 = vpow.pop %v485
        %v487 = vadd.f32 %v484, 1.0
        %v488 = vadd.f32 %v486, 1.0
        %v489 = vrcp.pop %v487
        %v490 = vmul.f32 1.0, %v489
        %v491 = vrcp.pop %v488
        %v492 = vmul.f32 1.0, %v491
        %v493 = vmul.f32 %v473, %v490
        %v494 = vmul.f32 %v477, %v492
        %495 = vst [vmem:[#allocation2] sm:$0xff] %v493
        %496 = vst [vmem:[#allocation2 + $0x8] sm:$0xff] %v494
        %v497 = vld [vmem:[#allocation2] ss:$4 sm:$0xf]
        %v498 = vpack.c.bf16 %v497, %v497
        %v499 = vld [vmem:[#allocation8] sm:$0xf]
        %v500 = vld [vmem:[#allocation8 + $0x4] sm:$0xf]
        %v501 = vld [vmem:[#allocation8 + $0x8] sm:$0xf]
        %v502 = vld [vmem:[#allocation8 + $0xc] sm:$0xf]
        %v503 = vld [vmem:[#allocation8 + $0x10] sm:$0xf]
        %v504 = vld [vmem:[#allocation8 + $0x14] sm:$0xf]
        %v505 = vld [vmem:[#allocation8 + $0x18] sm:$0xf]
        %v506 = vld [vmem:[#allocation8 + $0x1c] sm:$0xf]
        %v507 = vld [vmem:[#allocation8 + $0x20] sm:$0xf]
        %v508 = vld [vmem:[#allocation8 + $0x24] sm:$0xf]
        %v509 = vld [vmem:[#allocation8 + $0x28] sm:$0xf]
        %v510 = vld [vmem:[#allocation8 + $0x2c] sm:$0xf]
        %v511 = vld [vmem:[#allocation8 + $0x30] sm:$0xf]
        %v512 = vld [vmem:[#allocation8 + $0x34] sm:$0xf]
        %v513 = vld [vmem:[#allocation8 + $0x38] sm:$0xf]
        %v514 = vld [vmem:[#allocation8 + $0x3c] sm:$0xf]
        %s515 = scalar_lea.vmem [#allocation2], 1
        %v516 = vld [vmem:[%s515] ss:$4 sm:$0xf]
        %v517 = vpack.c.bf16 %v516, %v516
        %s518 = scalar_lea.vmem [#allocation8], 64
        %v519 = vld [vmem:[%s518] sm:$0xf]
        %v520 = vld [vmem:[%s518 + $0x4] sm:$0xf]
        %v521 = vld [vmem:[%s518 + $0x8] sm:$0xf]
        %v522 = vld [vmem:[%s518 + $0xc] sm:$0xf]
        %v523 = vld [vmem:[%s518 + $0x10] sm:$0xf]
        %v524 = vld [vmem:[%s518 + $0x14] sm:$0xf]
        %v525 = vld [vmem:[%s518 + $0x18] sm:$0xf]
        %v526 = vld [vmem:[%s518 + $0x1c] sm:$0xf]
        %v527 = vld [vmem:[%s518 + $0x20] sm:$0xf]
        %v528 = vld [vmem:[%s518 + $0x24] sm:$0xf]
        %v529 = vld [vmem:[%s518 + $0x28] sm:$0xf]
        %v530 = vld [vmem:[%s518 + $0x2c] sm:$0xf]
        %v531 = vld [vmem:[%s518 + $0x30] sm:$0xf]
        %v532 = vld [vmem:[%s518 + $0x34] sm:$0xf]
        %v533 = vld [vmem:[%s518 + $0x38] sm:$0xf]
        %v534 = vld [vmem:[%s518 + $0x3c] sm:$0xf]
        %v551 = vunpack.c.l.b16 %v519
        %v552 = vunpack.c.l.b16 %v520
        %v553 = vunpack.c.l.b16 %v521
        %v554 = vunpack.c.l.b16 %v522
        %v555 = vunpack.c.l.b16 %v523
        %v556 = vunpack.c.l.b16 %v524
        %v557 = vunpack.c.l.b16 %v525
        %v558 = vunpack.c.l.b16 %v526
        %v559 = vunpack.c.l.b16 %v527
        %v560 = vunpack.c.l.b16 %v528
        %v561 = vunpack.c.l.b16 %v529
        %v562 = vunpack.c.l.b16 %v530
        %v563 = vunpack.c.l.b16 %v531
        %v564 = vunpack.c.l.b16 %v532
        %v565 = vunpack.c.l.b16 %v533
        %v566 = vunpack.c.l.b16 %v534
        %v567 = vpack.c.b16 %v552, %v551
        %v568 = vpack.c.b16 %v554, %v553
        %v569 = vpack.c.b16 %v556, %v555
        %v570 = vpack.c.b16 %v558, %v557
        %v571 = vpack.c.b16 %v560, %v559
        %v572 = vpack.c.b16 %v562, %v561
        %v573 = vpack.c.b16 %v564, %v563
        %v574 = vpack.c.b16 %v566, %v565
        %583 = vmatprep.subr.bf16.mxu0 0
        %584 = vmatpush1.bf16.msra.mxu0 %v567
        %585 = vmatprep.subr.bf16.mxu0 0
        %586 = vmatpush1.bf16.msra.mxu0 %v568
        %587 = vmatprep.subr.bf16.mxu0 0
        %588 = vmatpush1.bf16.msra.mxu0 %v569
        %589 = vmatprep.subr.bf16.mxu0 0
        %590 = vmatpush1.bf16.msra.mxu0 %v570
        %591 = vmatprep.subr.bf16.mxu0 0
        %592 = vmatpush1.bf16.msra.mxu0 %v571
        %593 = vmatprep.subr.bf16.mxu0 0
        %594 = vmatpush1.bf16.msra.mxu0 %v572
        %595 = vmatprep.subr.bf16.mxu0 0
        %596 = vmatpush1.bf16.msra.mxu0 %v573
        %597 = vmatprep.subr.bf16.mxu0 0
        %598 = vmatpush1.bf16.msra.mxu0 %v574
        %599 = vmatprep.subr.bf16.mxu0 0
        %600 = vmatpush1.bf16.msra.mxu0 0
        %601 = vmatprep.subr.bf16.mxu0 0
        %602 = vmatpush1.bf16.msra.mxu0 0
        %603 = vmatprep.subr.bf16.mxu0 0
        %604 = vmatpush1.bf16.msra.mxu0 0
        %605 = vmatprep.subr.bf16.mxu0 0
        %606 = vmatpush1.bf16.msra.mxu0 0
        %607 = vmatprep.subr.bf16.mxu0 0
        %608 = vmatpush1.bf16.msra.mxu0 0
        %609 = vmatprep.subr.bf16.mxu0 0
        %610 = vmatpush1.bf16.msra.mxu0 0
        %611 = vmatprep.subr.bf16.mxu0 0
        %612 = vmatpush1.bf16.msra.mxu0 0
        %613 = vmatprep.subr.bf16.mxu0 0
        %614 = vmatpush1.bf16.msra.mxu0 0
        %615 = vmatprep.mubr.bf16.mxu0 0
        %616 = vmatmul.mubr.bf16.gmra.mrb[0].mxu0 %v517
        %v617 = vpop.f32.mrb[0].mxu0
        %v618 = vadd.f32 0.0, %v617
        %v619 = vpop.f32.mrb[0].mxu0
        %v620 = vpop.f32.mrb[0].mxu0
        %v621 = vpop.f32.mrb[0].mxu0
        %622 = vdwg.mxu0
        %v639 = vunpack.c.l.b16 %v499
        %v640 = vunpack.c.l.b16 %v500
        %v641 = vunpack.c.l.b16 %v501
        %v642 = vunpack.c.l.b16 %v502
        %v643 = vunpack.c.l.b16 %v503
        %v644 = vunpack.c.l.b16 %v504
        %v645 = vunpack.c.l.b16 %v505
        %v646 = vunpack.c.l.b16 %v506
        %v647 = vunpack.c.l.b16 %v507
        %v648 = vunpack.c.l.b16 %v508
        %v649 = vunpack.c.l.b16 %v509
        %v650 = vunpack.c.l.b16 %v510
        %v651 = vunpack.c.l.b16 %v511
        %v652 = vunpack.c.l.b16 %v512
        %v653 = vunpack.c.l.b16 %v513
        %v654 = vunpack.c.l.b16 %v514
        %v655 = vpack.c.b16 %v640, %v639
        %v656 = vpack.c.b16 %v642, %v641
        %v657 = vpack.c.b16 %v644, %v643
        %v658 = vpack.c.b16 %v646, %v645
        %v659 = vpack.c.b16 %v648, %v647
        %v660 = vpack.c.b16 %v650, %v649
        %v661 = vpack.c.b16 %v652, %v651
        %v662 = vpack.c.b16 %v654, %v653
        %671 = vmatprep.subr.bf16.mxu0 0
        %672 = vmatpush1.bf16.msra.mxu0 %v655
        %673 = vmatprep.subr.bf16.mxu0 0
        %674 = vmatpush1.bf16.msra.mxu0 %v656
        %675 = vmatprep.subr.bf16.mxu0 0
        %676 = vmatpush1.bf16.msra.mxu0 %v657
        %677 = vmatprep.subr.bf16.mxu0 0
        %678 = vmatpush1.bf16.msra.mxu0 %v658
        %679 = vmatprep.subr.bf16.mxu0 0
        %680 = vmatpush1.bf16.msra.mxu0 %v659
        %681 = vmatprep.subr.bf16.mxu0 0
        %682 = vmatpush1.bf16.msra.mxu0 %v660
        %683 = vmatprep.subr.bf16.mxu0 0
        %684 = vmatpush1.bf16.msra.mxu0 %v661
        %685 = vmatprep.subr.bf16.mxu0 0
        %686 = vmatpush1.bf16.msra.mxu0 %v662
        %687 = vmatprep.subr.bf16.mxu0 0
        %688 = vmatpush1.bf16.msra.mxu0 0
        %689 = vmatprep.subr.bf16.mxu0 0
        %690 = vmatpush1.bf16.msra.mxu0 0
        %691 = vmatprep.subr.bf16.mxu0 0
        %692 = vmatpush1.bf16.msra.mxu0 0
        %693 = vmatprep.subr.bf16.mxu0 0
        %694 = vmatpush1.bf16.msra.mxu0 0
        %695 = vmatprep.subr.bf16.mxu0 0
        %696 = vmatpush1.bf16.msra.mxu0 0
        %697 = vmatprep.subr.bf16.mxu0 0
        %698 = vmatpush1.bf16.msra.mxu0 0
        %699 = vmatprep.subr.bf16.mxu0 0
        %700 = vmatpush1.bf16.msra.mxu0 0
        %701 = vmatprep.subr.bf16.mxu0 0
        %702 = vmatpush1.bf16.msra.mxu0 0
        %703 = vmatprep.mubr.bf16.mxu0 0
        %704 = vmatmul.mubr.bf16.gmra.mrb[0].mxu0 %v498
        %v705 = vpop.f32.mrb[0].mxu0
        %v706 = vadd.f32 %v618, %v705
        %v707 = vpop.f32.mrb[0].mxu0
        %v708 = vpop.f32.mrb[0].mxu0
        %v709 = vpop.f32.mrb[0].mxu0
        %710 = vdwg.mxu0
        %s711 = scalar_lea.vmem [#allocation2], 2
        %v712 = vld [vmem:[%s711] ss:$4 sm:$0xf]
        %v713 = vpack.c.bf16 %v712, %v712
        %s714 = scalar_lea.vmem [#allocation8], 128
        %v715 = vld [vmem:[%s714] sm:$0xf]
        %v716 = vld [vmem:[%s714 + $0x4] sm:$0xf]
        %v717 = vld [vmem:[%s714 + $0x8] sm:$0xf]
        %v718 = vld [vmem:[%s714 + $0xc] sm:$0xf]
        %v719 = vld [vmem:[%s714 + $0x10] sm:$0xf]
        %v720 = vld [vmem:[%s714 + $0x14] sm:$0xf]
        %v721 = vld [vmem:[%s714 + $0x18] sm:$0xf]
        %v722 = vld [vmem:[%s714 + $0x1c] sm:$0xf]
        %v723 = vld [vmem:[%s714 + $0x20] sm:$0xf]
        %v724 = vld [vmem:[%s714 + $0x24] sm:$0xf]
        %v725 = vld [vmem:[%s714 + $0x28] sm:$0xf]
        %v726 = vld [vmem:[%s714 + $0x2c] sm:$0xf]
        %v727 = vld [vmem:[%s714 + $0x30] sm:$0xf]
        %v728 = vld [vmem:[%s714 + $0x34] sm:$0xf]
        %v729 = vld [vmem:[%s714 + $0x38] sm:$0xf]
        %v730 = vld [vmem:[%s714 + $0x3c] sm:$0xf]
        %v747 = vunpack.c.l.b16 %v715
        %v748 = vunpack.c.l.b16 %v716
        %v749 = vunpack.c.l.b16 %v717
        %v750 = vunpack.c.l.b16 %v718
        %v751 = vunpack.c.l.b16 %v719
        %v752 = vunpack.c.l.b16 %v720
        %v753 = vunpack.c.l.b16 %v721
        %v754 = vunpack.c.l.b16 %v722
        %v755 = vunpack.c.l.b16 %v723
        %v756 = vunpack.c.l.b16 %v724
        %v757 = vunpack.c.l.b16 %v725
        %v758 = vunpack.c.l.b16 %v726
        %v759 = vunpack.c.l.b16 %v727
        %v760 = vunpack.c.l.b16 %v728
        %v761 = vunpack.c.l.b16 %v729
        %v762 = vunpack.c.l.b16 %v730
        %v763 = vpack.c.b16 %v748, %v747
        %v764 = vpack.c.b16 %v750, %v749
        %v765 = vpack.c.b16 %v752, %v751
        %v766 = vpack.c.b16 %v754, %v753
        %v767 = vpack.c.b16 %v756, %v755
        %v768 = vpack.c.b16 %v758, %v757
        %v769 = vpack.c.b16 %v760, %v759
        %v770 = vpack.c.b16 %v762, %v761
        %779 = vmatprep.subr.bf16.mxu0 0
        %780 = vmatpush1.bf16.msra.mxu0 %v763
        %781 = vmatprep.subr.bf16.mxu0 0
        %782 = vmatpush1.bf16.msra.mxu0 %v764
        %783 = vmatprep.subr.bf16.mxu0 0
        %784 = vmatpush1.bf16.msra.mxu0 %v765
        %785 = vmatprep.subr.bf16.mxu0 0
        %786 = vmatpush1.bf16.msra.mxu0 %v766
        %787 = vmatprep.subr.bf16.mxu0 0
        %788 = vmatpush1.bf16.msra.mxu0 %v767
        %789 = vmatprep.subr.bf16.mxu0 0
        %790 = vmatpush1.bf16.msra.mxu0 %v768
        %791 = vmatprep.subr.bf16.mxu0 0
        %792 = vmatpush1.bf16.msra.mxu0 %v769
        %793 = vmatprep.subr.bf16.mxu0 0
        %794 = vmatpush1.bf16.msra.mxu0 %v770
        %795 = vmatprep.subr.bf16.mxu0 0
        %796 = vmatpush1.bf16.msra.mxu0 0
        %797 = vmatprep.subr.bf16.mxu0 0
        %798 = vmatpush1.bf16.msra.mxu0 0
        %799 = vmatprep.subr.bf16.mxu0 0
        %800 = vmatpush1.bf16.msra.mxu0 0
        %801 = vmatprep.subr.bf16.mxu0 0
        %802 = vmatpush1.bf16.msra.mxu0 0
        %803 = vmatprep.subr.bf16.mxu0 0
        %804 = vmatpush1.bf16.msra.mxu0 0
        %805 = vmatprep.subr.bf16.mxu0 0
        %806 = vmatpush1.bf16.msra.mxu0 0
        %807 = vmatprep.subr.bf16.mxu0 0
        %808 = vmatpush1.bf16.msra.mxu0 0
        %809 = vmatprep.subr.bf16.mxu0 0
        %810 = vmatpush1.bf16.msra.mxu0 0
        %811 = vmatprep.mubr.bf16.mxu0 0
        %812 = vmatmul.mubr.bf16.gmra.mrb[0].mxu0 %v713
        %v813 = vpop.f32.mrb[0].mxu0
        %v814 = vadd.f32 0.0, %v813
        %v815 = vpop.f32.mrb[0].mxu0
        %v816 = vpop.f32.mrb[0].mxu0
        %v817 = vpop.f32.mrb[0].mxu0
        %818 = vdwg.mxu0
        %v819 = vadd.f32 %v706, %v814
        %s820 = scalar_lea.vmem [#allocation2], 3
        %v821 = vld [vmem:[%s820] ss:$4 sm:$0xf]
        %v822 = vpack.c.bf16 %v821, %v821
        %s823 = scalar_lea.vmem [#allocation8], 192
        %v824 = vld [vmem:[%s823] sm:$0xf]
        %v825 = vld [vmem:[%s823 + $0x4] sm:$0xf]
        %v826 = vld [vmem:[%s823 + $0x8] sm:$0xf]
        %v827 = vld [vmem:[%s823 + $0xc] sm:$0xf]
        %v828 = vld [vmem:[%s823 + $0x10] sm:$0xf]
        %v829 = vld [vmem:[%s823 + $0x14] sm:$0xf]
        %v830 = vld [vmem:[%s823 + $0x18] sm:$0xf]
        %v831 = vld [vmem:[%s823 + $0x1c] sm:$0xf]
        %v832 = vld [vmem:[%s823 + $0x20] sm:$0xf]
        %v833 = vld [vmem:[%s823 + $0x24] sm:$0xf]
        %v834 = vld [vmem:[%s823 + $0x28] sm:$0xf]
        %v835 = vld [vmem:[%s823 + $0x2c] sm:$0xf]
        %v836 = vld [vmem:[%s823 + $0x30] sm:$0xf]
        %v837 = vld [vmem:[%s823 + $0x34] sm:$0xf]
        %v838 = vld [vmem:[%s823 + $0x38] sm:$0xf]
        %v839 = vld [vmem:[%s823 + $0x3c] sm:$0xf]
        %v856 = vunpack.c.l.b16 %v824
        %v857 = vunpack.c.l.b16 %v825
        %v858 = vunpack.c.l.b16 %v826
        %v859 = vunpack.c.l.b16 %v827
        %v860 = vunpack.c.l.b16 %v828
        %v861 = vunpack.c.l.b16 %v829
        %v862 = vunpack.c.l.b16 %v830
        %v863 = vunpack.c.l.b16 %v831
        %v864 = vunpack.c.l.b16 %v832
        %v865 = vunpack.c.l.b16 %v833
        %v866 = vunpack.c.l.b16 %v834
        %v867 = vunpack.c.l.b16 %v835
        %v868 = vunpack.c.l.b16 %v836
        %v869 = vunpack.c.l.b16 %v837
        %v870 = vunpack.c.l.b16 %v838
        %v871 = vunpack.c.l.b16 %v839
        %v872 = vpack.c.b16 %v857, %v856
        %v873 = vpack.c.b16 %v859, %v858
        %v874 = vpack.c.b16 %v861, %v860
        %v875 = vpack.c.b16 %v863, %v862
        %v876 = vpack.c.b16 %v865, %v864
        %v877 = vpack.c.b16 %v867, %v866
        %v878 = vpack.c.b16 %v869, %v868
        %v879 = vpack.c.b16 %v871, %v870
        %888 = vmatprep.subr.bf16.mxu0 0
        %889 = vmatpush1.bf16.msra.mxu0 %v872
        %890 = vmatprep.subr.bf16.mxu0 0
        %891 = vmatpush1.bf16.msra.mxu0 %v873
        %892 = vmatprep.subr.bf16.mxu0 0
        %893 = vmatpush1.bf16.msra.mxu0 %v874
        %894 = vmatprep.subr.bf16.mxu0 0
        %895 = vmatpush1.bf16.msra.mxu0 %v875
        %896 = vmatprep.subr.bf16.mxu0 0
        %897 = vmatpush1.bf16.msra.mxu0 %v876
        %898 = vmatprep.subr.bf16.mxu0 0
        %899 = vmatpush1.bf16.msra.mxu0 %v877
        %900 = vmatprep.subr.bf16.mxu0 0
        %901 = vmatpush1.bf16.msra.mxu0 %v878
        %902 = vmatprep.subr.bf16.mxu0 0
        %903 = vmatpush1.bf16.msra.mxu0 %v879
        %904 = vmatprep.subr.bf16.mxu0 0
        %905 = vmatpush1.bf16.msra.mxu0 0
        %906 = vmatprep.subr.bf16.mxu0 0
        %907 = vmatpush1.bf16.msra.mxu0 0
        %908 = vmatprep.subr.bf16.mxu0 0
        %909 = vmatpush1.bf16.msra.mxu0 0
        %910 = vmatprep.subr.bf16.mxu0 0
        %911 = vmatpush1.bf16.msra.mxu0 0
        %912 = vmatprep.subr.bf16.mxu0 0
        %913 = vmatpush1.bf16.msra.mxu0 0
        %914 = vmatprep.subr.bf16.mxu0 0
        %915 = vmatpush1.bf16.msra.mxu0 0
        %916 = vmatprep.subr.bf16.mxu0 0
        %917 = vmatpush1.bf16.msra.mxu0 0
        %918 = vmatprep.subr.bf16.mxu0 0
        %919 = vmatpush1.bf16.msra.mxu0 0
        %920 = vmatprep.mubr.bf16.mxu0 0
        %921 = vmatmul.mubr.bf16.gmra.mrb[0].mxu0 %v822
        %v922 = vpop.f32.mrb[0].mxu0
        %v923 = vadd.f32 0.0, %v922
        %v924 = vpop.f32.mrb[0].mxu0
        %v925 = vpop.f32.mrb[0].mxu0
        %v926 = vpop.f32.mrb[0].mxu0
        %927 = vdwg.mxu0
        %v928 = vadd.f32 %v819, %v923
        %vm929 = vcmask 1043456
        %v930 = vsel %vm929, %v928, 0.0
        %931 = vadd.xlane.f32.xlu0 %v930
        %v932 = vpop.xlane.xlu0 %931
        %v933 = vmul.f32 %v932, 0.03125
        %v934 = vmul.f32 %v928, %v928
        %v935 = vsel %vm929, %v934, 0.0
        %936 = vadd.xlane.f32.xlu0 %v935
        %v937 = vpop.xlane.xlu0 %936
        %v938 = vmul.f32 %v937, 0.03125
        %v939 = vmul.f32 %v933, %v933
        %v940 = vsub.f32 %v938, %v939
        %v941 = vsub.f32 %v928, %v933
        %v942 = vadd.f32 %v940, 1e-05
        %v943 = vrsqrt.pop %v942
        %v944 = vmul.f32 %v941, %v943
        %v945 = vld [vmem:[%s3] sm:$0x1]
        %v947 = vlaneseq
        %v948 = vshrl.u32 %v947, 7
        %v949 = vsub.s32 0, %v948
        %v950 = vrot.slane %v945, %v949
        %v952 = vmul.f32 %v944, %v950
        %v953 = vld [vmem:[%s4] sm:$0x1]
        %v955 = vlaneseq
        %v956 = vshrl.u32 %v955, 7
        %v957 = vsub.s32 0, %v956
        %v958 = vrot.slane %v953, %v957
        %v960 = vadd.f32 %v952, %v958
        %v961 = vxor.u32 %v960, 2147483648
        %v962 = vmul.f32 %v961, 1.442695
        %v963 = vpow.pop %v962
        %v964 = vadd.f32 %v963, 1.0
        %v965 = vrcp.pop %v964
        %v966 = vmul.f32 1.0, %v965
        %v967 = vmul.f32 %v960, %v966
        %v968 = vpack.c.bf16 %v967, %v967
        %v969 = vld [vmem:[#allocation9] sm:$0xf]
        %v970 = vld [vmem:[#allocation9 + $0x4] sm:$0xf]
        %v971 = vld [vmem:[#allocation9 + $0x8] sm:$0xf]
        %v972 = vld [vmem:[#allocation9 + $0xc] sm:$0xf]
        %v973 = vld [vmem:[#allocation9 + $0x10] sm:$0xf]
        %v974 = vld [vmem:[#allocation9 + $0x14] sm:$0xf]
        %v975 = vld [vmem:[#allocation9 + $0x18] sm:$0xf]
        %v976 = vld [vmem:[#allocation9 + $0x1c] sm:$0xf]
        %v977 = vld [vmem:[#allocation9 + $0x20] sm:$0xf]
        %v978 = vld [vmem:[#allocation9 + $0x24] sm:$0xf]
        %v979 = vld [vmem:[#allocation9 + $0x28] sm:$0xf]
        %v980 = vld [vmem:[#allocation9 + $0x2c] sm:$0xf]
        %v981 = vld [vmem:[#allocation9 + $0x30] sm:$0xf]
        %v982 = vld [vmem:[#allocation9 + $0x34] sm:$0xf]
        %v983 = vld [vmem:[#allocation9 + $0x38] sm:$0xf]
        %v984 = vld [vmem:[#allocation9 + $0x3c] sm:$0xf]
        %v1001 = vunpack.c.l.b16 %v969
        %v1002 = vunpack.c.l.b16 %v970
        %v1003 = vunpack.c.l.b16 %v971
        %v1004 = vunpack.c.l.b16 %v972
        %v1005 = vunpack.c.l.b16 %v973
        %v1006 = vunpack.c.l.b16 %v974
        %v1007 = vunpack.c.l.b16 %v975
        %v1008 = vunpack.c.l.b16 %v976
        %v1009 = vunpack.c.l.b16 %v977
        %v1010 = vunpack.c.l.b16 %v978
        %v1011 = vunpack.c.l.b16 %v979
        %v1012 = vunpack.c.l.b16 %v980
        %v1013 = vunpack.c.l.b16 %v981
        %v1014 = vunpack.c.l.b16 %v982
        %v1015 = vunpack.c.l.b16 %v983
        %v1016 = vunpack.c.l.b16 %v984
        %v1017 = vpack.c.b16 %v1002, %v1001
        %v1018 = vpack.c.b16 %v1004, %v1003
        %v1019 = vpack.c.b16 %v1006, %v1005
        %v1020 = vpack.c.b16 %v1008, %v1007
        %v1021 = vpack.c.b16 %v1010, %v1009
        %v1022 = vpack.c.b16 %v1012, %v1011
        %v1023 = vpack.c.b16 %v1014, %v1013
        %v1024 = vpack.c.b16 %v1016, %v1015
        %1033 = vmatprep.subr.bf16.mxu0 0
        %1034 = vmatpush1.bf16.msra.mxu0 %v1017
        %1035 = vmatprep.subr.bf16.mxu0 0
        %1036 = vmatpush1.bf16.msra.mxu0 %v1018
        %1037 = vmatprep.subr.bf16.mxu0 0
        %1038 = vmatpush1.bf16.msra.mxu0 %v1019
        %1039 = vmatprep.subr.bf16.mxu0 0
        %1040 = vmatpush1.bf16.msra.mxu0 %v1020
        %1041 = vmatprep.subr.bf16.mxu0 0
        %1042 = vmatpush1.bf16.msra.mxu0 %v1021
        %1043 = vmatprep.subr.bf16.mxu0 0
        %1044 = vmatpush1.bf16.msra.mxu0 %v1022
        %1045 = vmatprep.subr.bf16.mxu0 0
        %1046 = vmatpush1.bf16.msra.mxu0 %v1023
        %1047 = vmatprep.subr.bf16.mxu0 0
        %1048 = vmatpush1.bf16.msra.mxu0 %v1024
        %1049 = vmatprep.subr.bf16.mxu0 0
        %1050 = vmatpush1.bf16.msra.mxu0 0
        %1051 = vmatprep.subr.bf16.mxu0 0
        %1052 = vmatpush1.bf16.msra.mxu0 0
        %1053 = vmatprep.subr.bf16.mxu0 0
        %1054 = vmatpush1.bf16.msra.mxu0 0
        %1055 = vmatprep.subr.bf16.mxu0 0
        %1056 = vmatpush1.bf16.msra.mxu0 0
        %1057 = vmatprep.subr.bf16.mxu0 0
        %1058 = vmatpush1.bf16.msra.mxu0 0
        %1059 = vmatprep.subr.bf16.mxu0 0
        %1060 = vmatpush1.bf16.msra.mxu0 0
        %1061 = vmatprep.subr.bf16.mxu0 0
        %1062 = vmatpush1.bf16.msra.mxu0 0
        %1063 = vmatprep.subr.bf16.mxu0 0
        %1064 = vmatpush1.bf16.msra.mxu0 0
        %1065 = vmatprep.mubr.bf16.mxu0 0
        %1066 = vmatmul.mubr.bf16.gmra.mrb[0].mxu0 %v968
        %v1067 = vpop.f32.mrb[0].mxu0
        %v1068 = vadd.f32 0.0, %v1067
        %v1069 = vpop.f32.mrb[0].mxu0
        %v1070 = vpop.f32.mrb[0].mxu0
        %v1071 = vpop.f32.mrb[0].mxu0
        %1072 = vdwg.mxu0
        %1073 = vst [vmem:[%s331] sm:$0xf] %v1068
        %s1074 = sand.u32 %s180, 1
        %s1075 = scalar_lea.sflag [#allocation5], %s1074
        %s1076 = sand.u32 %s180, 1
        %s1077 = smul.addr %s1076, 4
        %s1078 = scalar_lea.vmem [#allocation11], %s1077
        // Predicated region
        $region61: #{tpu_custom_call.1} parent=43 // pred_check
          %p1079 = pneg %p190
        $region62: #{tpu_custom_call.1} parent=43 // pred_check_branch
          %1081 = sbr.rel (%p1079) target = $region64
        $region63: #{tpu_custom_call.1} parent=43 // pred_region
          %s1083 = ssub.s32 64, 64
          %1084 = vsyncadd %s1075, %s1083
          %s1085 = sadd.s32 %s30, %s29
          %s1086 = smul.addr %s1085, 64
          %s1087 = scalar_lea.hbm %s6, %s1086
          %s1089 = sshll.u32 %s1078, 4
          %s1090 = int_to_ptr.vmem [resolvable:$true] %s1089
          %1092 = dma.vmem_to_hbm [thread:$0]  %s1090, 64, %s1087, %s1075
        $region64: #{tpu_custom_call.1} parent=43 // pred_fallthru
          _
      $region44: #{tpu_custom_call.1} parent=5 // pred_fallthru
        _
      %p1093 = scmp.le.s32.totalorder 2, %s20
      // Predicated region
      $region65: #{tpu_custom_call.1} parent=5 // pred_check
        %p1094 = pneg %p1093
      $region66: #{tpu_custom_call.1} parent=5 // pred_check_branch
        %1096 = sbr.rel (%p1094) target = $region68
      $region67: #{tpu_custom_call.1} parent=5 // pred_region
        %s1097 = ssub.s32 %s20, 2
        // Predicated region
        $region69: #{tpu_custom_call.1} parent=67 // pred_check
          %p1098 = pneg %p196
        $region70: #{tpu_custom_call.1} parent=67 // pred_check_branch
          %1100 = sbr.rel (%p1098) target = $region72
        $region71: #{tpu_custom_call.1} parent=67 // pred_region
          %s1101 = sand.u32 %s181, 1
          %s1102 = scalar_lea.sflag [#allocation5], %s1101
          %s1103 = sand.u32 %s181, 1
          %s1104 = smul.addr %s1103, 4
          %s1105 = scalar_lea.vmem [#allocation11], %s1104
          %1106 = dma.done %s1102, 64
        $region72: #{tpu_custom_call.1} parent=67 // pred_fallthru
          _
      $region68: #{tpu_custom_call.1} parent=5 // pred_fallthru
        _
    $region6: #{tpu_custom_call.1} parent=1 // loop_footer
      %s24 = sadd.s32 1, %s20
    $region7: #{tpu_custom_call.1} parent=1 // loop_footer_branch
      %19 = sbr.rel target = $region3
    $region8: #{tpu_custom_call.1} parent=1 // loop_exit
      _
    %1107 = vsyncpa [#allocation4], 1
    %s1108 = scalar_lea.sflag [#allocation4], 1
    %1109 = vsyncpa %s1108, 1
    %1110 = vsyncpa [#allocation7], 1
    %1111 = vsyncpa [#allocation10], 1
    %1112 = vsyncpa [#allocation5], 1
    %s1113 = scalar_lea.sflag [#allocation5], 1
    %1114 = vsyncpa %s1113, 1

</llo_original>
